<compile_context>
chip_gen: v7x
topology: tpu7x:2x2x1
jax: 0.10.0
libtpu: 0.0.40
codegen_flags: <defaults>
</compile_context>

<pallas_src>
import functools

import jax
import jax.numpy as jnp
from jax.experimental import pallas as pl
from jax.experimental.pallas import tpu as pltpu

LN_EPS = 1e-5  # PyTorch nn.LayerNorm default


def _ffn_kernel(x_ref, w1_ref, b1_ref, w2_ref, b2_ref, g_ref, be_ref, o_ref,
                acc_ref, *, d_model, eps, matmul_dtype):
    # x_ref:  (tm, D_pad)  f32
    # w1_ref: (D_pad, tf)  bf16    b1_ref: (1, tf)    f32
    # w2_ref: (tf, D_pad)  bf16    b2_ref: (1, D_pad) f32
    # g_ref/be_ref: (1, D_pad) f32
    # acc_ref: (tm, D_pad) f32 scratch, accumulates ff2 output over F chunks.
    f = pl.program_id(1)

    @pl.when(f == 0)
    def _():
        acc_ref[...] = jnp.zeros_like(acc_ref)

    x = x_ref[...]
    xm = x.astype(matmul_dtype)

    # ff1 chunk + bias + ReLU (bf16 operands, f32 accumulation on the MXU).
    h = jnp.dot(xm, w1_ref[...], preferred_element_type=jnp.float32) + b1_ref[...]
    h = jnp.maximum(h, 0.0)
    # TODO(synk): dropout would be applied to `h` here in training mode.

    # ff2 partial product, accumulated across the F grid axis.
    acc_ref[...] += jnp.dot(h.astype(matmul_dtype), w2_ref[...],
                            preferred_element_type=jnp.float32)

    @pl.when(f == pl.num_programs(1) - 1)
    def _():
        z = x.astype(jnp.float32) + acc_ref[...] + b2_ref[...]
        d_pad = z.shape[-1]
        if d_model == d_pad:
            mean = jnp.mean(z, axis=-1, keepdims=True)
            cent = z - mean
            var = jnp.mean(cent * cent, axis=-1, keepdims=True)
        else:
            # LayerNorm statistics only over the true model_dim columns; padded
            # columns of z are exactly zero by construction.
            col = jax.lax.broadcasted_iota(jnp.int32, z.shape, 1)
            mask = col < d_model
            inv_d = 1.0 / d_model
            mean = jnp.sum(jnp.where(mask, z, 0.0), axis=-1, keepdims=True) * inv_d
            cent = jnp.where(mask, z - mean, 0.0)
            var = jnp.sum(cent * cent, axis=-1, keepdims=True) * inv_d
        zn = cent * jax.lax.rsqrt(var + eps)
        o_ref[...] = (zn * g_ref[...] + be_ref[...]).astype(o_ref.dtype)


def feed_forward(x, w1, b1, w2, b2, gamma, beta, *,
                 tm=256, tf=512, matmul_dtype=jnp.bfloat16):
    """x: (B, S, D). w1: (D, F), b1: (F,), w2: (F, D), b2/gamma/beta: (D,)."""
    B, S, D = x.shape
    F = w1.shape[1]
    rows = B * S

    def rup(a, b):
        return (a + b - 1) // b * b

    D_pad = rup(D, 128)                 # lane-dense output / LN axis
    tf = min(tf, rup(F, 128))           # F chunk size (multiple of 128)
    F_pad = rup(F, tf)
    tm = min(tm, rup(rows, 8))          # don't over-tile tiny problems
    rows_pad = rup(rows, tm)            # pad rows instead of asserting divisibility

    f32 = jnp.float32
    x2d = x.reshape(rows, D).astype(f32)
    if rows_pad != rows or D_pad != D:
        x2d = jnp.zeros((rows_pad, D_pad), f32).at[:rows, :D].set(x2d)
    w1p = jnp.zeros((D_pad, F_pad), matmul_dtype).at[:D, :F].set(w1.astype(matmul_dtype))
    w2p = jnp.zeros((F_pad, D_pad), matmul_dtype).at[:F, :D].set(w2.astype(matmul_dtype))
    b1p = jnp.zeros((1, F_pad), f32).at[0, :F].set(b1.astype(f32))
    b2p = jnp.zeros((1, D_pad), f32).at[0, :D].set(b2.astype(f32))
    gp = jnp.zeros((1, D_pad), f32).at[0, :D].set(gamma.astype(f32))
    bp = jnp.zeros((1, D_pad), f32).at[0, :D].set(beta.astype(f32))

    grid = (rows_pad // tm, F_pad // tf)

    kernel = functools.partial(_ffn_kernel, d_model=D, eps=LN_EPS,
                               matmul_dtype=matmul_dtype)

    bytes_in = (x2d.size * x2d.dtype.itemsize
                + w1p.size * w1p.dtype.itemsize
                + w2p.size * w2p.dtype.itemsize
                + (b1p.size + b2p.size + gp.size + bp.size) * 4)
    cost = pl.CostEstimate(
        flops=4 * rows * D * F,                            # two matmuls
        transcendentals=rows,                              # rsqrt per row
        bytes_accessed=bytes_in + rows_pad * D_pad * x.dtype.itemsize,
    )

    out = pl.pallas_call(
        kernel,
        out_shape=jax.ShapeDtypeStruct((rows_pad, D_pad), x.dtype),
        grid_spec=pltpu.PrefetchScalarGridSpec(
            num_scalar_prefetch=0,
            grid=grid,
            in_specs=[
                pl.BlockSpec((tm, D_pad), lambda i, f: (i, 0)),   # x tile
                pl.BlockSpec((D_pad, tf), lambda i, f: (0, f)),   # W1 F-chunk
                pl.BlockSpec((1, tf), lambda i, f: (0, f)),       # b1 F-chunk
                pl.BlockSpec((tf, D_pad), lambda i, f: (f, 0)),   # W2 F-chunk
                pl.BlockSpec((1, D_pad), lambda i, f: (0, 0)),    # b2
                pl.BlockSpec((1, D_pad), lambda i, f: (0, 0)),    # gamma
                pl.BlockSpec((1, D_pad), lambda i, f: (0, 0)),    # beta
            ],
            out_specs=pl.BlockSpec((tm, D_pad), lambda i, f: (i, 0)),
            scratch_shapes=[pltpu.VMEM((tm, D_pad), jnp.float32)],
        ),
        compiler_params=pltpu.CompilerParams(
            dimension_semantics=("parallel", "arbitrary"),
            vmem_limit_bytes=64 * 1024 * 1024,
        ),
        cost_estimate=cost,
    )(x2d, w1p, b1p, w2p, b2p, gp, bp)

    return out[:rows, :D].reshape(B, S, D)


def reference(x, w1, b1, w2, b2, gamma, beta, matmul_dtype=jnp.bfloat16):
    # Mirrors kernel dtype policy: bf16 matmul operands, f32 accumulation,
    # f32 residual + LayerNorm.
    xm = x.astype(matmul_dtype)
    h = jnp.dot(xm, w1.astype(matmul_dtype),
                preferred_element_type=jnp.float32) + b1
    h = jnp.maximum(h, 0.0)
    y = jnp.dot(h.astype(matmul_dtype), w2.astype(matmul_dtype),
                preferred_element_type=jnp.float32) + b2
    z = x + y
    mean = jnp.mean(z, axis=-1, keepdims=True)
    var = jnp.mean((z - mean) ** 2, axis=-1, keepdims=True)
    return (z - mean) / jnp.sqrt(var + LN_EPS) * gamma + beta


if __name__ == "__main__":
    B, S, D, Ff = 2, 8, 32, 64  # batch, seq, model_dimension, d_ff

    key = jax.random.PRNGKey(0)
    kx, k1, k2, k3, k4 = jax.random.split(key, 5)

    x = jax.random.normal(kx, (B, S, D), dtype=jnp.float32)
    w1 = jax.random.normal(k1, (D, Ff), dtype=jnp.float32) * (1.0 / jnp.sqrt(D))
    b1 = jax.random.normal(k2, (Ff,), dtype=jnp.float32) * 0.01
    w2 = jax.random.normal(k3, (Ff, D), dtype=jnp.float32) * (1.0 / jnp.sqrt(Ff))
    b2 = jax.random.normal(k4, (D,), dtype=jnp.float32) * 0.01
    gamma = jnp.ones((D,), dtype=jnp.float32)
    beta = jnp.zeros((D,), dtype=jnp.float32)

    out = feed_forward(x, w1, b1, w2, b2, gamma, beta)
    out = jax.block_until_ready(out)

    ref = reference(x, w1, b1, w2, b2, gamma, beta)
    assert out.shape == (B, S, D)
    assert jnp.allclose(out, ref, atol=5e-3, rtol=5e-3), (
        "mismatch vs reference, max abs diff = %e" % float(jnp.max(jnp.abs(out - ref))))

    print("KERNEL_OK")
</pallas_src>

<mosaic_0001>
module attributes {stable_mosaic.version = 11 : i64} {
  func.func @_ffn_kernel(%arg0: i32, %arg1: i32, %arg2: memref<16x128xf32, #tpu.memory_space<vmem>>, %arg3: memref<128x128xbf16, #tpu.memory_space<vmem>>, %arg4: memref<1x128xf32, #tpu.memory_space<vmem>>, %arg5: memref<128x128xbf16, #tpu.memory_space<vmem>>, %arg6: memref<1x128xf32, #tpu.memory_space<vmem>>, %arg7: memref<1x128xf32, #tpu.memory_space<vmem>>, %arg8: memref<1x128xf32, #tpu.memory_space<vmem>>, %arg9: memref<16x128xf32, #tpu.memory_space<vmem>>, %arg10: memref<16x128xf32, #tpu.memory_space<vmem>>) attributes {dimension_semantics = [#tpu.dimension_semantics<parallel>, #tpu.dimension_semantics<arbitrary>], iteration_bounds = array<i64: 1, 1>, scalar_prefetch = 0 : i64, scratch_operands = 1 : i64, tpu.core_type = #tpu.core_type<tc>, window_params = [{transform_indices = @transform_0, window_bounds = array<i64: 16, 128>}, {transform_indices = @transform_1, window_bounds = array<i64: 128, 128>}, {transform_indices = @transform_2, window_bounds = array<i64: 1, 128>}, {transform_indices = @transform_3, window_bounds = array<i64: 128, 128>}, {pipeline_mode = #tpu.pipeline_mode<synchronous>, transform_indices = @transform_4, window_bounds = array<i64: 1, 128>}, {pipeline_mode = #tpu.pipeline_mode<synchronous>, transform_indices = @transform_5, window_bounds = array<i64: 1, 128>}, {pipeline_mode = #tpu.pipeline_mode<synchronous>, transform_indices = @transform_6, window_bounds = array<i64: 1, 128>}, {transform_indices = @transform_7, window_bounds = array<i64: 16, 128>}]} {
    %c0_i32 = arith.constant 0 : i32
    %0 = arith.cmpi eq, %arg1, %c0_i32 : i32
    %1 = arith.extui %0 : i1 to i32
    %c0_i32_0 = arith.constant 0 : i32
    %2 = arith.cmpi ne, %1, %c0_i32_0 : i32
    scf.if %2 {
      %cst_16 = arith.constant 0.000000e+00 : f32
      %21 = vector.broadcast %cst_16 : f32 to vector<16x128xf32>
      %c0_17 = arith.constant 0 : index
      %c0_18 = arith.constant 0 : index
      %22 = vector.load %arg10[%c0_17, %c0_18] : memref<16x128xf32, #tpu.memory_space<vmem>>, vector<16x128xf32>
      tpu.vector_store %arg10[%c0_17, %c0_18], %21 {strides = array<i32>} : memref<16x128xf32, #tpu.memory_space<vmem>>, vector<16x128xf32>,
    } else {
    }
    %c0 = arith.constant 0 : index
    %c0_1 = arith.constant 0 : index
    %3 = vector.load %arg2[%c0, %c0_1] : memref<16x128xf32, #tpu.memory_space<vmem>>, vector<16x128xf32>
    %4 = arith.truncf %3 : vector<16x128xf32> to vector<16x128xbf16>
    %c0_2 = arith.constant 0 : index
    %c0_3 = arith.constant 0 : index
    %5 = vector.load %arg3[%c0_2, %c0_3] : memref<128x128xbf16, #tpu.memory_space<vmem>>, vector<128x128xbf16>
    %cst = arith.constant dense<0.000000e+00> : vector<16x128xf32>
    %6 = tpu.matmul %4, %5, %cst {dimension_numbers = #tpu.dot_dimension_numbers<[1], [0], [0], [1], [0, 0, 1, 1], [], []>} : vector<16x128xbf16>, vector<128x128xbf16>, vector<16x128xf32> -> vector<16x128xf32>
    %c0_4 = arith.constant 0 : index
    %c0_5 = arith.constant 0 : index
    %7 = vector.load %arg4[%c0_4, %c0_5] : memref<1x128xf32, #tpu.memory_space<vmem>>, vector<1x128xf32>
    %8 = vector.broadcast %7 : vector<1x128xf32> to vector<16x128xf32>
    %9 = arith.addf %6, %8 : vector<16x128xf32>
    %cst_6 = arith.constant 0.000000e+00 : f32
    %10 = vector.broadcast %cst_6 : f32 to vector<16x128xf32>
    %11 = arith.maximumf %9, %10 : vector<16x128xf32>
    %c0_7 = arith.constant 0 : index
    %c0_8 = arith.constant 0 : index
    %12 = vector.load %arg10[%c0_7, %c0_8] : memref<16x128xf32, #tpu.memory_space<vmem>>, vector<16x128xf32>
    %13 = arith.truncf %11 : vector<16x128xf32> to vector<16x128xbf16>
    %c0_9 = arith.constant 0 : index
    %c0_10 = arith.constant 0 : index
    %14 = vector.load %arg5[%c0_9, %c0_10] : memref<128x128xbf16, #tpu.memory_space<vmem>>, vector<128x128xbf16>
    %cst_11 = arith.constant dense<0.000000e+00> : vector<16x128xf32>
    %15 = tpu.matmul %13, %14, %cst_11 {dimension_numbers = #tpu.dot_dimension_numbers<[1], [0], [0], [1], [0, 0, 1, 1], [], []>} : vector<16x128xbf16>, vector<128x128xbf16>, vector<16x128xf32> -> vector<16x128xf32>
    %16 = arith.addf %12, %15 : vector<16x128xf32>
    %c0_12 = arith.constant 0 : index
    %c0_13 = arith.constant 0 : index
    %17 = vector.load %arg10[%c0_12, %c0_13] : memref<16x128xf32, #tpu.memory_space<vmem>>, vector<16x128xf32>
    tpu.vector_store %arg10[%c0_12, %c0_13], %16 {strides = array<i32>} : memref<16x128xf32, #tpu.memory_space<vmem>>, vector<16x128xf32>,
    %c0_i32_14 = arith.constant 0 : i32
    %18 = arith.cmpi eq, %arg1, %c0_i32_14 : i32
    %19 = arith.extui %18 : i1 to i32
    %c0_i32_15 = arith.constant 0 : i32
    %20 = arith.cmpi ne, %19, %c0_i32_15 : i32
    scf.if %20 {
      %c0_16 = arith.constant 0 : index
      %c0_17 = arith.constant 0 : index
      %21 = vector.load %arg10[%c0_16, %c0_17] : memref<16x128xf32, #tpu.memory_space<vmem>>, vector<16x128xf32>
      %22 = arith.addf %3, %21 : vector<16x128xf32>
      %c0_18 = arith.constant 0 : index
      %c0_19 = arith.constant 0 : index
      %23 = vector.load %arg6[%c0_18, %c0_19] : memref<1x128xf32, #tpu.memory_space<vmem>>, vector<1x128xf32>
      %24 = vector.broadcast %23 : vector<1x128xf32> to vector<16x128xf32>
      %25 = arith.addf %22, %24 : vector<16x128xf32>
      %26 = tpu.iota {dimensions = array<i32: 1>} : vector<16x128xi32>
      %c32_i32 = arith.constant 32 : i32
      %27 = vector.broadcast %c32_i32 : i32 to vector<16x128xi32>
      %28 = arith.cmpi slt, %26, %27 : vector<16x128xi32>
      %cst_20 = arith.constant 0.000000e+00 : f32
      %29 = vector.broadcast %cst_20 : f32 to vector<16x128xf32>
      %30 = arith.select %28, %25, %29 : vector<16x128xi1>, vector<16x128xf32>
      %cst_21 = arith.constant dense<0.000000e+00> : vector<16xf32>
      %31 = vector.multi_reduction <add>, %30, %cst_21 [1] : vector<16x128xf32> to vector<16xf32>
      %32 = vector.shape_cast %31 : vector<16xf32> to vector<16x1xf32>
      %cst_22 = arith.constant 3.125000e-02 : f32
      %33 = vector.broadcast %cst_22 : f32 to vector<16x1xf32>
      %34 = arith.mulf %32, %33 : vector<16x1xf32>
      %35 = vector.broadcast %34 : vector<16x1xf32> to vector<16x128xf32>
      %36 = arith.subf %25, %35 : vector<16x128xf32>
      %cst_23 = arith.constant 0.000000e+00 : f32
      %37 = vector.broadcast %cst_23 : f32 to vector<16x128xf32>
      %38 = arith.select %28, %36, %37 : vector<16x128xi1>, vector<16x128xf32>
      %39 = arith.mulf %38, %38 : vector<16x128xf32>
      %cst_24 = arith.constant dense<0.000000e+00> : vector<16xf32>
      %40 = vector.multi_reduction <add>, %39, %cst_24 [1] : vector<16x128xf32> to vector<16xf32>
      %41 = vector.shape_cast %40 : vector<16xf32> to vector<16x1xf32>
      %cst_25 = arith.constant 3.125000e-02 : f32
      %42 = vector.broadcast %cst_25 : f32 to vector<16x1xf32>
      %43 = arith.mulf %41, %42 : vector<16x1xf32>
      %cst_26 = arith.constant 9.99999974E-6 : f32
      %44 = vector.broadcast %cst_26 : f32 to vector<16x1xf32>
      %45 = arith.addf %43, %44 : vector<16x1xf32>
      %46 = math.rsqrt %45 : vector<16x1xf32>
      %47 = vector.broadcast %46 : vector<16x1xf32> to vector<16x128xf32>
      %48 = arith.mulf %38, %47 : vector<16x128xf32>
      %c0_27 = arith.constant 0 : index
      %c0_28 = arith.constant 0 : index
      %49 = vector.load %arg7[%c0_27, %c0_28] : memref<1x128xf32, #tpu.memory_space<vmem>>, vector<1x128xf32>
      %50 = vector.broadcast %49 : vector<1x128xf32> to vector<16x128xf32>
      %51 = arith.mulf %48, %50 : vector<16x128xf32>
      %c0_29 = arith.constant 0 : index
      %c0_30 = arith.constant 0 : index
      %52 = vector.load %arg8[%c0_29, %c0_30] : memref<1x128xf32, #tpu.memory_space<vmem>>, vector<1x128xf32>
      %53 = vector.broadcast %52 : vector<1x128xf32> to vector<16x128xf32>
      %54 = arith.addf %51, %53 : vector<16x128xf32>
      %c0_31 = arith.constant 0 : index
      %c0_32 = arith.constant 0 : index
      %55 = vector.load %arg9[%c0_31, %c0_32] : memref<16x128xf32, #tpu.memory_space<vmem>>, vector<16x128xf32>
      tpu.vector_store %arg9[%c0_31, %c0_32], %54 {strides = array<i32>} : memref<16x128xf32, #tpu.memory_space<vmem>>, vector<16x128xf32>,
    } else {
    }
    return
  }
  func.func @transform_0(%arg0: i32, %arg1: i32) -> (i32, i32) {
    %c0_i32 = arith.constant 0 : i32
    %c0_i32_0 = arith.constant 0 : i32
    return %arg0, %c0_i32 : i32, i32
  }
  func.func @transform_1(%arg0: i32, %arg1: i32) -> (i32, i32) {
    %c0_i32 = arith.constant 0 : i32
    %c0_i32_0 = arith.constant 0 : i32
    return %c0_i32, %arg1 : i32, i32
  }
  func.func @transform_2(%arg0: i32, %arg1: i32) -> (i32, i32) {
    %c0_i32 = arith.constant 0 : i32
    %c0_i32_0 = arith.constant 0 : i32
    return %c0_i32, %arg1 : i32, i32
  }
  func.func @transform_3(%arg0: i32, %arg1: i32) -> (i32, i32) {
    %c0_i32 = arith.constant 0 : i32
    %c0_i32_0 = arith.constant 0 : i32
    return %arg1, %c0_i32 : i32, i32
  }
  func.func @transform_4(%arg0: i32, %arg1: i32) -> (i32, i32) {
    %c0_i32 = arith.constant 0 : i32
    %c0_i32_0 = arith.constant 0 : i32
    %c0_i32_1 = arith.constant 0 : i32
    return %c0_i32, %c0_i32_0 : i32, i32
  }
  func.func @transform_5(%arg0: i32, %arg1: i32) -> (i32, i32) {
    %c0_i32 = arith.constant 0 : i32
    %c0_i32_0 = arith.constant 0 : i32
    %c0_i32_1 = arith.constant 0 : i32
    return %c0_i32, %c0_i32_0 : i32, i32
  }
  func.func @transform_6(%arg0: i32, %arg1: i32) -> (i32, i32) {
    %c0_i32 = arith.constant 0 : i32
    %c0_i32_0 = arith.constant 0 : i32
    %c0_i32_1 = arith.constant 0 : i32
    return %c0_i32, %c0_i32_0 : i32, i32
  }
  func.func @transform_7(%arg0: i32, %arg1: i32) -> (i32, i32) {
    %c0_i32 = arith.constant 0 : i32
    %c0_i32_0 = arith.constant 0 : i32
    return %arg0, %c0_i32 : i32, i32
  }
}

</mosaic_0001>

<llo_original>
// kernel: tpu_custom_call.1
$region0: #{tpu_custom_call.1}
  #allocation0 [shape = 'u32[]', space=smem, size = 0x4, offset = 0x4, fixed_abs, tag = 'smem constant byte address 0x4 - core index']
  #allocation1 [shape = 'u32[144,128]{1,0:T(1,128)}', space=vmem, size = 0x12000, scoped, tag = 'internal scratch']
  #allocation2 [shape = 'f32[16,128]{1,0:T(8,128)}', space=vmem, size = 0x2000, scoped, tag = 'scratch operand']
  %s0 = inlined_call_operand.hbm [shape: f32[16,128], index: 0, kind: input, shape index: {}]
  %s1 = inlined_call_operand.hbm [shape: bf16[128,128], index: 1, kind: input, shape index: {}]
  %s2 = inlined_call_operand.hbm [shape: f32[1,128], index: 2, kind: input, shape index: {}]
  %s3 = inlined_call_operand.hbm [shape: bf16[128,128], index: 3, kind: input, shape index: {}]
  %s4 = inlined_call_operand.hbm [shape: f32[1,128], index: 4, kind: input, shape index: {}]
  %s5 = inlined_call_operand.hbm [shape: f32[1,128], index: 5, kind: input, shape index: {}]
  %s6 = inlined_call_operand.hbm [shape: f32[1,128], index: 6, kind: input, shape index: {}]
  %s7 = inlined_call_operand.hbm [shape: f32[16,128], index: 7, kind: output, shape index: {}]
  %s8 = sld [smem:[#allocation0]]
  $region74: #{tpu_custom_call.1} parent=0
    _
  %s10 = ssub.s32 1, %s8
  %s11 = scalar_select 0, %s10, %s8
  $region1: #{tpu_custom_call.1} parent=0
    #allocation3 [shape = 'u8[8192]{0}', space=vmem, size = 0x2000, scoped, tag = 'input window, operand 0, single buffered']
    #allocation4 [shape = 's32[1]{0}', space=sflag, size = 0x4, scoped, tag = 'scoped memory for tpu_custom_call.1']
    #allocation5 [shape = 's32[1]{0}', space=sflag, size = 0x4, scoped, tag = 'scoped memory for tpu_custom_call.1']
    #allocation6 [shape = 'u8[32768]{0}', space=vmem, size = 0x8000, scoped, tag = 'input window, operand 1, single buffered']
    #allocation7 [shape = 's32[1]{0}', space=sflag, size = 0x4, scoped, tag = 'scoped memory for tpu_custom_call.1']
    #allocation8 [shape = 'u8[512]{0}', space=vmem, size = 0x400, scoped, tag = 'input window, operand 2, single buffered']
    #allocation9 [shape = 'u8[32768]{0}', space=vmem, size = 0x8000, scoped, tag = 'input window, operand 3, single buffered']
    #allocation10 [shape = 's32[1]{0}', space=sflag, size = 0x4, scoped, tag = 'scoped memory for tpu_custom_call.1']
    #allocation11 [shape = 'u8[512]{0}', space=vmem, size = 0x400, scoped, tag = 'input window, operand 4, single buffered']
    #allocation12 [shape = 'u8[512]{0}', space=vmem, size = 0x400, scoped, tag = 'input window, operand 5, single buffered']
    #allocation13 [shape = 's32[1]{0}', space=sflag, size = 0x4, scoped, tag = 'scoped memory for tpu_custom_call.1']
    #allocation14 [shape = 'u8[512]{0}', space=vmem, size = 0x400, scoped, tag = 'input window, operand 6, single buffered']
    #allocation15 [shape = 'u8[8192]{0}', space=vmem, size = 0x2000, scoped, tag = 'output window, operand 0, single buffered']
    %12 = vsyncpa [#allocation4], 0
    %13 = vsyncpa [#allocation7], 0
    %14 = vsyncpa [#allocation10], 0
    %15 = vsyncpa [#allocation13], 0
    %16 = vsyncpa [#allocation5], 0
    // Predicated region
    $region2: #{tpu_custom_call.1} parent=1 // pred_check
      _
    $region3: #{tpu_custom_call.1} parent=1 // pred_check_branch
      %18 = sbr.rel (0) target = $region5
    $region4: #{tpu_custom_call.1} parent=1 // pred_region
      %s20 = ssub.s32 256, 256
      %21 = vsyncadd [#allocation4], %s20
      %s22 = sshll.u32 [#allocation3], 4
      %s23 = int_to_ptr.vmem [resolvable:$true] %s22
      %28 = dma.hbm_to_vmem [thread:$0]  %s0, 256, %s23, [#allocation4], 128, 128, 8
    $region5: #{tpu_custom_call.1} parent=1 // pred_fallthru
      _
    // Predicated region
    $region6: #{tpu_custom_call.1} parent=1 // pred_check
      _
    $region7: #{tpu_custom_call.1} parent=1 // pred_check_branch
      %30 = sbr.rel (0) target = $region9
    $region8: #{tpu_custom_call.1} parent=1 // pred_region
      %s32 = ssub.s32 1024, 1024
      %33 = vsyncadd [#allocation7], %s32
      %s34 = sshll.u32 [#allocation6], 4
      %s35 = int_to_ptr.vmem [resolvable:$true] %s34
      %40 = dma.hbm_to_vmem [thread:$0]  %s1, 1024, %s35, [#allocation7], 64, 64, 4
    $region9: #{tpu_custom_call.1} parent=1 // pred_fallthru
      _
    // Predicated region
    $region10: #{tpu_custom_call.1} parent=1 // pred_check
      _
    $region11: #{tpu_custom_call.1} parent=1 // pred_check_branch
      %42 = sbr.rel (0) target = $region13
    $region12: #{tpu_custom_call.1} parent=1 // pred_region
      %s44 = ssub.s32 16, 16
      %45 = vsyncadd [#allocation7], %s44
      %s47 = sshll.u32 [#allocation8], 4
      %s48 = int_to_ptr.vmem [resolvable:$true] %s47
      %50 = dma.hbm_to_vmem [thread:$0]  %s2, 16, %s48, [#allocation7]
    $region13: #{tpu_custom_call.1} parent=1 // pred_fallthru
      _
    // Predicated region
    $region14: #{tpu_custom_call.1} parent=1 // pred_check
      _
    $region15: #{tpu_custom_call.1} parent=1 // pred_check_branch
      %52 = sbr.rel (0) target = $region17
    $region16: #{tpu_custom_call.1} parent=1 // pred_region
      %s54 = ssub.s32 1024, 1024
      %55 = vsyncadd [#allocation10], %s54
      %s56 = sshll.u32 [#allocation9], 4
      %s57 = int_to_ptr.vmem [resolvable:$true] %s56
      %62 = dma.hbm_to_vmem [thread:$0]  %s3, 1024, %s57, [#allocation10], 64, 64, 4
    $region17: #{tpu_custom_call.1} parent=1 // pred_fallthru
      _
    // Predicated region
    $region18: #{tpu_custom_call.1} parent=1 // pred_check
      _
    $region19: #{tpu_custom_call.1} parent=1 // pred_check_branch
      %64 = sbr.rel (0) target = $region21
    $region20: #{tpu_custom_call.1} parent=1 // pred_region
      %s66 = ssub.s32 16, 16
      %67 = vsyncadd [#allocation10], %s66
      %s69 = sshll.u32 [#allocation11], 4
      %s70 = int_to_ptr.vmem [resolvable:$true] %s69
      %72 = dma.hbm_to_vmem [thread:$0]  %s4, 16, %s70, [#allocation10]
    $region21: #{tpu_custom_call.1} parent=1 // pred_fallthru
      _
    // Predicated region
    $region22: #{tpu_custom_call.1} parent=1 // pred_check
      _
    $region23: #{tpu_custom_call.1} parent=1 // pred_check_branch
      %74 = sbr.rel (0) target = $region25
    $region24: #{tpu_custom_call.1} parent=1 // pred_region
      %s76 = ssub.s32 16, 16
      %77 = vsyncadd [#allocation13], %s76
      %s79 = sshll.u32 [#allocation12], 4
      %s80 = int_to_ptr.vmem [resolvable:$true] %s79
      %82 = dma.hbm_to_vmem [thread:$0]  %s5, 16, %s80, [#allocation13]
    $region25: #{tpu_custom_call.1} parent=1 // pred_fallthru
      _
    // Predicated region
    $region26: #{tpu_custom_call.1} parent=1 // pred_check
      _
    $region27: #{tpu_custom_call.1} parent=1 // pred_check_branch
      %84 = sbr.rel (0) target = $region29
    $region28: #{tpu_custom_call.1} parent=1 // pred_region
      %s86 = ssub.s32 16, 16
      %87 = vsyncadd [#allocation13], %s86
      %s89 = sshll.u32 [#allocation14], 4
      %s90 = int_to_ptr.vmem [resolvable:$true] %s89
      %92 = dma.hbm_to_vmem [thread:$0]  %s6, 16, %s90, [#allocation13]
    $region29: #{tpu_custom_call.1} parent=1 // pred_fallthru
      _
    // Predicated region
    $region30: #{tpu_custom_call.1} parent=1 // pred_check
      _
    $region31: #{tpu_custom_call.1} parent=1 // pred_check_branch
      %94 = sbr.rel (0) target = $region33
    $region32: #{tpu_custom_call.1} parent=1 // pred_region
      %95 = dma.done [#allocation4], 256
    $region33: #{tpu_custom_call.1} parent=1 // pred_fallthru
      _
    // Predicated region
    $region34: #{tpu_custom_call.1} parent=1 // pred_check
      _
    $region35: #{tpu_custom_call.1} parent=1 // pred_check_branch
      %97 = sbr.rel (0) target = $region37
    $region36: #{tpu_custom_call.1} parent=1 // pred_region
      %98 = dma.done [#allocation7], 1024
    $region37: #{tpu_custom_call.1} parent=1 // pred_fallthru
      _
    // Predicated region
    $region38: #{tpu_custom_call.1} parent=1 // pred_check
      _
    $region39: #{tpu_custom_call.1} parent=1 // pred_check_branch
      %100 = sbr.rel (0) target = $region41
    $region40: #{tpu_custom_call.1} parent=1 // pred_region
      %101 = dma.done [#allocation7], 16
    $region41: #{tpu_custom_call.1} parent=1 // pred_fallthru
      _
    // Predicated region
    $region42: #{tpu_custom_call.1} parent=1 // pred_check
      _
    $region43: #{tpu_custom_call.1} parent=1 // pred_check_branch
      %103 = sbr.rel (0) target = $region45
    $region44: #{tpu_custom_call.1} parent=1 // pred_region
      %104 = dma.done [#allocation10], 1024
    $region45: #{tpu_custom_call.1} parent=1 // pred_fallthru
      _
    // Predicated region
    $region46: #{tpu_custom_call.1} parent=1 // pred_check
      _
    $region47: #{tpu_custom_call.1} parent=1 // pred_check_branch
      %106 = sbr.rel (0) target = $region49
    $region48: #{tpu_custom_call.1} parent=1 // pred_region
      %107 = dma.done [#allocation10], 16
    $region49: #{tpu_custom_call.1} parent=1 // pred_fallthru
      _
    // Predicated region
    $region50: #{tpu_custom_call.1} parent=1 // pred_check
      _
    $region51: #{tpu_custom_call.1} parent=1 // pred_check_branch
      %109 = sbr.rel (0) target = $region53
    $region52: #{tpu_custom_call.1} parent=1 // pred_region
      %110 = dma.done [#allocation13], 16
    $region53: #{tpu_custom_call.1} parent=1 // pred_fallthru
      _
    // Predicated region
    $region54: #{tpu_custom_call.1} parent=1 // pred_check
      _
    $region55: #{tpu_custom_call.1} parent=1 // pred_check_branch
      %112 = sbr.rel (0) target = $region57
    $region56: #{tpu_custom_call.1} parent=1 // pred_region
      %113 = dma.done [#allocation13], 16
    $region57: #{tpu_custom_call.1} parent=1 // pred_fallthru
      _
    %p115 = scmp.eq.s32.totalorder 0, 0
    // Predicated region
    $region58: #{tpu_custom_call.1} parent=1 // pred_check
      %p116 = pneg %p115
    $region59: #{tpu_custom_call.1} parent=1 // pred_check_branch
      %118 = sbr.rel (%p116) target = $region61
    $region60: #{tpu_custom_call.1} parent=1 // pred_region
      %119 = vst [vmem:[#allocation2] sm:$0xff] 0.0
      %120 = vst [vmem:[#allocation2 + $0x8] sm:$0xff] 0.0
    $region61: #{tpu_custom_call.1} parent=1 // pred_fallthru
      _
    %v121 = vld [vmem:[#allocation3] sm:$0xff]
    %v122 = vld [vmem:[#allocation3 + $0x8] sm:$0xff]
    %v123 = vpack.c.bf16 %v122, %v121
    %v124 = vld [vmem:[#allocation6] sm:$0xf]
    %v125 = vld [vmem:[#allocation6 + $0x4] sm:$0xf]
    %v126 = vld [vmem:[#allocation6 + $0x8] sm:$0xf]
    %v127 = vld [vmem:[#allocation6 + $0xc] sm:$0xf]
    %v128 = vld [vmem:[#allocation6 + $0x10] sm:$0xf]
    %v129 = vld [vmem:[#allocation6 + $0x14] sm:$0xf]
    %v130 = vld [vmem:[#allocation6 + $0x18] sm:$0xf]
    %v131 = vld [vmem:[#allocation6 + $0x1c] sm:$0xf]
    %v132 = vld [vmem:[#allocation6 + $0x20] sm:$0xf]
    %v133 = vld [vmem:[#allocation6 + $0x24] sm:$0xf]
    %v134 = vld [vmem:[#allocation6 + $0x28] sm:$0xf]
    %v135 = vld [vmem:[#allocation6 + $0x2c] sm:$0xf]
    %v136 = vld [vmem:[#allocation6 + $0x30] sm:$0xf]
    %v137 = vld [vmem:[#allocation6 + $0x34] sm:$0xf]
    %v138 = vld [vmem:[#allocation6 + $0x38] sm:$0xf]
    %v139 = vld [vmem:[#allocation6 + $0x3c] sm:$0xf]
    %v140 = vld [vmem:[#allocation8] sm:$0x1]
    %v142 = vlaneseq
    %v143 = vshrl.u32 %v142, 7
    %v144 = vsub.s32 0, %v143
    %v145 = vrot.slane %v140, %v144
    %v163 = vunpack.c.l.b16 %v124
    %v164 = vunpack.c.l.b16 %v125
    %v165 = vunpack.c.l.b16 %v126
    %v166 = vunpack.c.l.b16 %v127
    %v167 = vunpack.c.l.b16 %v128
    %v168 = vunpack.c.l.b16 %v129
    %v169 = vunpack.c.l.b16 %v130
    %v170 = vunpack.c.l.b16 %v131
    %v171 = vunpack.c.l.b16 %v132
    %v172 = vunpack.c.l.b16 %v133
    %v173 = vunpack.c.l.b16 %v134
    %v174 = vunpack.c.l.b16 %v135
    %v175 = vunpack.c.l.b16 %v136
    %v176 = vunpack.c.l.b16 %v137
    %v177 = vunpack.c.l.b16 %v138
    %v178 = vunpack.c.l.b16 %v139
    %v179 = vpack.c.b16 %v164, %v163
    %v180 = vpack.c.b16 %v166, %v165
    %v181 = vpack.c.b16 %v168, %v167
    %v182 = vpack.c.b16 %v170, %v169
    %v183 = vpack.c.b16 %v172, %v171
    %v184 = vpack.c.b16 %v174, %v173
    %v185 = vpack.c.b16 %v176, %v175
    %v186 = vpack.c.b16 %v178, %v177
    %195 = vmatprep.subr.bf16.mxu0 0
    %196 = vmatpush1.bf16.msra.mxu0 %v179
    %197 = vmatprep.subr.bf16.mxu0 0
    %198 = vmatpush1.bf16.msra.mxu0 %v180
    %199 = vmatprep.subr.bf16.mxu0 0
    %200 = vmatpush1.bf16.msra.mxu0 %v181
    %201 = vmatprep.subr.bf16.mxu0 0
    %202 = vmatpush1.bf16.msra.mxu0 %v182
    %203 = vmatprep.subr.bf16.mxu0 0
    %204 = vmatpush1.bf16.msra.mxu0 %v183
    %205 = vmatprep.subr.bf16.mxu0 0
    %206 = vmatpush1.bf16.msra.mxu0 %v184
    %207 = vmatprep.subr.bf16.mxu0 0
    %208 = vmatpush1.bf16.msra.mxu0 %v185
    %209 = vmatprep.subr.bf16.mxu0 0
    %210 = vmatpush1.bf16.msra.mxu0 %v186
    %211 = vmatprep.subr.bf16.mxu0 0
    %212 = vmatpush1.bf16.msra.mxu0 0
    %213 = vmatprep.subr.bf16.mxu0 0
    %214 = vmatpush1.bf16.msra.mxu0 0
    %215 = vmatprep.subr.bf16.mxu0 0
    %216 = vmatpush1.bf16.msra.mxu0 0
    %217 = vmatprep.subr.bf16.mxu0 0
    %218 = vmatpush1.bf16.msra.mxu0 0
    %219 = vmatprep.subr.bf16.mxu0 0
    %220 = vmatpush1.bf16.msra.mxu0 0
    %221 = vmatprep.subr.bf16.mxu0 0
    %222 = vmatpush1.bf16.msra.mxu0 0
    %223 = vmatprep.subr.bf16.mxu0 0
    %224 = vmatpush1.bf16.msra.mxu0 0
    %225 = vmatprep.subr.bf16.mxu0 0
    %226 = vmatpush1.bf16.msra.mxu0 0
    %227 = vmatprep.mubr.bf16.mxu0 0
    %228 = vmatmul.mubr.bf16.gmra.mrb[0].mxu0 %v123
    %v229 = vpop.f32.mrb[0].mxu0
    %v230 = vadd.f32 %v145, %v229
    %v231 = vpop.f32.mrb[0].mxu0
    %v232 = vpop.f32.mrb[0].mxu0
    %v233 = vadd.f32 %v145, %v232
    %v234 = vpop.f32.mrb[0].mxu0
    %235 = vdwg.mxu0
    %v236 = vmax.f32 %v230, 0.0
    %v237 = vmax.f32 %v233, 0.0
    %v238 = vld [vmem:[#allocation2] sm:$0xff]
    %v239 = vld [vmem:[#allocation2 + $0x8] sm:$0xff]
    %v240 = vpack.c.bf16 %v237, %v236
    %v241 = vld [vmem:[#allocation9] sm:$0xf]
    %v242 = vld [vmem:[#allocation9 + $0x4] sm:$0xf]
    %v243 = vld [vmem:[#allocation9 + $0x8] sm:$0xf]
    %v244 = vld [vmem:[#allocation9 + $0xc] sm:$0xf]
    %v245 = vld [vmem:[#allocation9 + $0x10] sm:$0xf]
    %v246 = vld [vmem:[#allocation9 + $0x14] sm:$0xf]
    %v247 = vld [vmem:[#allocation9 + $0x18] sm:$0xf]
    %v248 = vld [vmem:[#allocation9 + $0x1c] sm:$0xf]
    %v249 = vld [vmem:[#allocation9 + $0x20] sm:$0xf]
    %v250 = vld [vmem:[#allocation9 + $0x24] sm:$0xf]
    %v251 = vld [vmem:[#allocation9 + $0x28] sm:$0xf]
    %v252 = vld [vmem:[#allocation9 + $0x2c] sm:$0xf]
    %v253 = vld [vmem:[#allocation9 + $0x30] sm:$0xf]
    %v254 = vld [vmem:[#allocation9 + $0x34] sm:$0xf]
    %v255 = vld [vmem:[#allocation9 + $0x38] sm:$0xf]
    %v256 = vld [vmem:[#allocation9 + $0x3c] sm:$0xf]
    %v273 = vunpack.c.l.b16 %v241
    %v274 = vunpack.c.l.b16 %v242
    %v275 = vunpack.c.l.b16 %v243
    %v276 = vunpack.c.l.b16 %v244
    %v277 = vunpack.c.l.b16 %v245
    %v278 = vunpack.c.l.b16 %v246
    %v279 = vunpack.c.l.b16 %v247
    %v280 = vunpack.c.l.b16 %v248
    %v281 = vunpack.c.l.b16 %v249
    %v282 = vunpack.c.l.b16 %v250
    %v283 = vunpack.c.l.b16 %v251
    %v284 = vunpack.c.l.b16 %v252
    %v285 = vunpack.c.l.b16 %v253
    %v286 = vunpack.c.l.b16 %v254
    %v287 = vunpack.c.l.b16 %v255
    %v288 = vunpack.c.l.b16 %v256
    %v289 = vpack.c.b16 %v274, %v273
    %v290 = vpack.c.b16 %v276, %v275
    %v291 = vpack.c.b16 %v278, %v277
    %v292 = vpack.c.b16 %v280, %v279
    %v293 = vpack.c.b16 %v282, %v281
    %v294 = vpack.c.b16 %v284, %v283
    %v295 = vpack.c.b16 %v286, %v285
    %v296 = vpack.c.b16 %v288, %v287
    %305 = vmatprep.subr.bf16.mxu0 0
    %306 = vmatpush1.bf16.msra.mxu0 %v289
    %307 = vmatprep.subr.bf16.mxu0 0
    %308 = vmatpush1.bf16.msra.mxu0 %v290
    %309 = vmatprep.subr.bf16.mxu0 0
    %310 = vmatpush1.bf16.msra.mxu0 %v291
    %311 = vmatprep.subr.bf16.mxu0 0
    %312 = vmatpush1.bf16.msra.mxu0 %v292
    %313 = vmatprep.subr.bf16.mxu0 0
    %314 = vmatpush1.bf16.msra.mxu0 %v293
    %315 = vmatprep.subr.bf16.mxu0 0
    %316 = vmatpush1.bf16.msra.mxu0 %v294
    %317 = vmatprep.subr.bf16.mxu0 0
    %318 = vmatpush1.bf16.msra.mxu0 %v295
    %319 = vmatprep.subr.bf16.mxu0 0
    %320 = vmatpush1.bf16.msra.mxu0 %v296
    %321 = vmatprep.subr.bf16.mxu0 0
    %322 = vmatpush1.bf16.msra.mxu0 0
    %323 = vmatprep.subr.bf16.mxu0 0
    %324 = vmatpush1.bf16.msra.mxu0 0
    %325 = vmatprep.subr.bf16.mxu0 0
    %326 = vmatpush1.bf16.msra.mxu0 0
    %327 = vmatprep.subr.bf16.mxu0 0
    %328 = vmatpush1.bf16.msra.mxu0 0
    %329 = vmatprep.subr.bf16.mxu0 0
    %330 = vmatpush1.bf16.msra.mxu0 0
    %331 = vmatprep.subr.bf16.mxu0 0
    %332 = vmatpush1.bf16.msra.mxu0 0
    %333 = vmatprep.subr.bf16.mxu0 0
    %334 = vmatpush1.bf16.msra.mxu0 0
    %335 = vmatprep.subr.bf16.mxu0 0
    %336 = vmatpush1.bf16.msra.mxu0 0
    %337 = vmatprep.mubr.bf16.mxu0 0
    %338 = vmatmul.mubr.bf16.gmra.mrb[0].mxu0 %v240
    %v339 = vpop.f32.mrb[0].mxu0
    %v340 = vadd.f32 0.0, %v339
    %v341 = vpop.f32.mrb[0].mxu0
    %v342 = vpop.f32.mrb[0].mxu0
    %v343 = vadd.f32 0.0, %v342
    %v344 = vpop.f32.mrb[0].mxu0
    %345 = vdwg.mxu0
    %v346 = vadd.f32 %v238, %v340
    %v347 = vadd.f32 %v239, %v343
    %348 = vst [vmem:[#allocation2] sm:$0xff] %v346
    %349 = vst [vmem:[#allocation2 + $0x8] sm:$0xff] %v347
    // Predicated region
    $region62: #{tpu_custom_call.1} parent=1 // pred_check
      %p350 = pneg %p115
    $region63: #{tpu_custom_call.1} parent=1 // pred_check_branch
      %352 = sbr.rel (%p350) target = $region65
    $region64: #{tpu_custom_call.1} parent=1 // pred_region
      %v353 = vld [vmem:[#allocation2] sm:$0xff]
      %v354 = vld [vmem:[#allocation2 + $0x8] sm:$0xff]
      %v355 = vadd.f32 %v121, %v353
      %v356 = vadd.f32 %v122, %v354
      %v357 = vld [vmem:[#allocation11] sm:$0x1]
      %v359 = vlaneseq
      %v360 = vshrl.u32 %v359, 7
      %v361 = vsub.s32 0, %v360
      %v362 = vrot.slane %v357, %v361
      %v364 = vadd.f32 %v355, %v362
      %v365 = vadd.f32 %v356, %v362
      %v366 = vlaneseq
      %v367 = vand.u32 %v366, 127
      %vm368 = vcmp.lt.s32.totalorder %v367, 32
      %v369 = vsel %vm368, %v364, 0.0
      %v370 = vsel %vm368, %v365, 0.0
      %371 = vadd.xlane.f32.xlu0 %v369
      %v372 = vpop.xlane.xlu0 %371
      %373 = vadd.xlane.f32.xlu0 %v370
      %v374 = vpop.xlane.xlu0 %373
      %v375 = vmul.f32 %v372, 0.03125
      %v376 = vmul.f32 %v374, 0.03125
      %v377 = vsub.f32 %v364, %v375
      %v378 = vsub.f32 %v365, %v376
      %v379 = vsel %vm368, %v377, 0.0
      %v380 = vsel %vm368, %v378, 0.0
      %v381 = vmul.f32 %v379, %v379
      %v382 = vmul.f32 %v380, %v380
      %383 = vadd.xlane.f32.xlu0 %v381
      %v384 = vpop.xlane.xlu0 %383
      %385 = vadd.xlane.f32.xlu0 %v382
      %v386 = vpop.xlane.xlu0 %385
      %v387 = vmul.f32 %v384, 0.03125
      %v388 = vmul.f32 %v386, 0.03125
      %v389 = vadd.f32 %v387, 1e-05
      %v390 = vadd.f32 %v388, 1e-05
      %v391 = vrsqrt.pop %v389
      %v392 = vrsqrt.pop %v390
      %v393 = vmul.f32 %v379, %v391
      %v394 = vmul.f32 %v380, %v392
      %v395 = vld [vmem:[#allocation12] sm:$0x1]
      %v397 = vlaneseq
      %v398 = vshrl.u32 %v397, 7
      %v399 = vsub.s32 0, %v398
      %v400 = vrot.slane %v395, %v399
      %v402 = vmul.f32 %v393, %v400
      %v403 = vmul.f32 %v394, %v400
      %v404 = vld [vmem:[#allocation14] sm:$0x1]
      %v406 = vlaneseq
      %v407 = vshrl.u32 %v406, 7
      %v408 = vsub.s32 0, %v407
      %v409 = vrot.slane %v404, %v408
      %v411 = vadd.f32 %v402, %v409
      %v412 = vadd.f32 %v403, %v409
      %413 = vst [vmem:[#allocation15] sm:$0xff] %v411
      %414 = vst [vmem:[#allocation15 + $0x8] sm:$0xff] %v412
    $region65: #{tpu_custom_call.1} parent=1 // pred_fallthru
      _
    // Predicated region
    $region66: #{tpu_custom_call.1} parent=1 // pred_check
      _
    $region67: #{tpu_custom_call.1} parent=1 // pred_check_branch
      %416 = sbr.rel (0) target = $region69
    $region68: #{tpu_custom_call.1} parent=1 // pred_region
      %s418 = ssub.s32 256, 256
      %419 = vsyncadd [#allocation5], %s418
      %s420 = sshll.u32 [#allocation15], 4
      %s421 = int_to_ptr.vmem [resolvable:$true] %s420
      %426 = dma.vmem_to_hbm [thread:$0]  %s421, 256, %s7, [#allocation5], 128, 128, 8
    $region69: #{tpu_custom_call.1} parent=1 // pred_fallthru
      _
    // Predicated region
    $region70: #{tpu_custom_call.1} parent=1 // pred_check
      _
    $region71: #{tpu_custom_call.1} parent=1 // pred_check_branch
      %428 = sbr.rel (0) target = $region73
    $region72: #{tpu_custom_call.1} parent=1 // pred_region
      %429 = dma.done [#allocation5], 256
    $region73: #{tpu_custom_call.1} parent=1 // pred_fallthru
      _
    %430 = vsyncpa [#allocation4], 1
    %431 = vsyncpa [#allocation7], 1
    %432 = vsyncpa [#allocation10], 1
    %433 = vsyncpa [#allocation13], 1
    %434 = vsyncpa [#allocation5], 1

</llo_original>
